<compile_context>
chip_gen: v6e
topology: v6e:2x2x1
jax: 0.10.0
libtpu: 0.0.40
codegen_flags: <defaults>
</compile_context>

<pallas_src>
import jax
import jax.numpy as jnp
from jax import lax
from jax.experimental import pallas as pl
from jax.experimental.pallas import tpu as pltpu


# --------------------------------- kernel ------------------------------------

def _linear_embed_kernel(x_ref, w_ref, b_ref, o_ref):
    # x_ref: (C, TN) bf16   w_ref: (C, E_blk) bf16   b_ref: (1, E_blk) f32
    # o_ref: (TN, E_blk)
    # Contract over C (axis 0 of both) == x^T @ w; this fuses the NCHW -> (N, C)
    # transpose of the PyTorch forward into the MXU matmul (f32 accumulation).
    # TODO(synk): once HBM traffic is no longer the bottleneck, check with
    # pl.lower_as_mlir that the transposed-LHS contraction emits no per-step XLU copy.
    y = lax.dot_general(x_ref[...], w_ref[...], (((0,), (0,)), ((), ())),
                        preferred_element_type=jnp.float32)           # (TN, E_blk) f32
    o_ref[...] = (y + b_ref[...].astype(jnp.float32)).astype(o_ref.dtype)


# --------------------------------- wrapper -----------------------------------

def _round_up(n, m):
    return ((n + m - 1) // m) * m


def _pick_tile(n, candidates=(1024, 512, 256, 128)):
    for t in candidates:
        if n % t == 0:
            return t
    return candidates[-1]  # caller pads n to a multiple of 128, so 128 always divides


def mlp_pallas(x, w, b, *, out_dtype=jnp.bfloat16):
    """SegFormer MLP head: flatten(2).transpose(1, 2) -> Linear(input_dim, embed_dim).

    x: (B, C, H, W)  input feature map (NCHW, as in the PyTorch module)
    w: (C, E)        == torch Linear.weight.T (pre-transposed)
    b: (E,)          Linear bias
    returns: (B, H*W, E) in `out_dtype` (default bf16: halves the dominant HBM write)
    """
    B, C, H, W = x.shape
    E = w.shape[1]
    N = H * W

    # flatten(2): free row-major reshape (no transpose). Cast operands to bf16 once here
    # so the kernel DMAs half the bytes; bias stays f32 (added after f32 accumulation).
    x_cn = x.reshape(B, C, N).astype(jnp.bfloat16)
    w_bf = w.astype(jnp.bfloat16)
    b2 = b.reshape(1, E).astype(jnp.float32)

    # Pad token / embed dims to multiples of 128 -> lane-dense unmasked stores, bounded
    # tiles (never a full-extent VMEM-blowing fallback block). Padded rows/cols are
    # sliced off after the call.
    Np, Ep = _round_up(N, 128), _round_up(E, 128)
    if Np != N:
        x_cn = jnp.pad(x_cn, ((0, 0), (0, 0), (0, Np - N)))
    if Ep != E:
        w_bf = jnp.pad(w_bf, ((0, 0), (0, Ep - E)))
        b2 = jnp.pad(b2, ((0, 0), (0, Ep - E)))

    TN = _pick_tile(Np)
    # v7x has 2 TensorCores: guarantee >= 2 parallel grid steps for tiny inputs.
    while B * (Np // TN) < 2 and TN >= 256:
        TN //= 2

    out_bytes = jnp.dtype(out_dtype).itemsize
    # Working set if the full (C, Ep) weight is made resident (E grid axis collapsed).
    resident_budget = (2 * C * TN * 2            # x tile (bf16), double-buffered
                       + 2 * C * Ep * 2          # weight (bf16), constant block
                       + 2 * Ep * 4              # bias (f32)
                       + 2 * TN * Ep * out_bytes)  # output tile, double-buffered
    vmem_cap = 40 * 1024 * 1024  # conservative: fits v7x's 64 MiB VMEM with headroom

    cost = pl.CostEstimate(
        flops=2 * B * N * E * C,
        transcendentals=0,
        bytes_accessed=(x_cn.size * 2 + w_bf.size * 2 + b2.size * 4
                        + B * Np * Ep * out_bytes),
    )

    if resident_budget <= vmem_cap:
        # ---- Path A: weight/bias resident in VMEM, E grid axis collapsed ----------
        grid = (B, Np // TN)
        out_p = pl.pallas_call(
            _linear_embed_kernel,
            out_shape=jax.ShapeDtypeStruct((B, Np, Ep), out_dtype),
            grid=grid,
            in_specs=[
                pl.BlockSpec((None, C, TN), lambda bi, ni: (bi, 0, ni)),  # x (C, TN)
                pl.BlockSpec((C, Ep),       lambda bi, ni: (0, 0)),       # resident W
                pl.BlockSpec((1, Ep),       lambda bi, ni: (0, 0)),       # resident b
            ],
            out_specs=pl.BlockSpec((None, TN, Ep), lambda bi, ni: (bi, ni, 0)),
            compiler_params=pltpu.CompilerParams(
                dimension_semantics=("parallel", "parallel"),
                vmem_limit_bytes=int(min(56 * 1024 * 1024,
                                         max(32 * 1024 * 1024,
                                             resident_budget + (8 << 20)))),
            ),
            cost_estimate=cost,
        )(x_cn, w_bf, b2)
    else:
        # ---- Path B: tile E too; token axis innermost so the weight block only -----
        # ---- changes on the outer ei axis (weight re-read only E/TE times/batch). --
        TE = _pick_tile(Ep)
        grid = (B, Ep // TE, Np // TN)
        out_p = pl.pallas_call(
            _linear_embed_kernel,
            out_shape=jax.ShapeDtypeStruct((B, Np, Ep), out_dtype),
            grid=grid,
            in_specs=[
                pl.BlockSpec((None, C, TN), lambda bi, ei, ni: (bi, 0, ni)),
                pl.BlockSpec((C, TE),       lambda bi, ei, ni: (0, ei)),
                pl.BlockSpec((1, TE),       lambda bi, ei, ni: (0, ei)),
            ],
            out_specs=pl.BlockSpec((None, TN, TE), lambda bi, ei, ni: (bi, ni, ei)),
            compiler_params=pltpu.CompilerParams(
                dimension_semantics=("parallel", "parallel", "parallel"),
                vmem_limit_bytes=48 * 1024 * 1024,
            ),
            cost_estimate=cost,
        )(x_cn, w_bf, b2)

    if (Np, Ep) != (N, E):
        out_p = out_p[:, :N, :E]
    return out_p


# ------------------------------------ main ------------------------------------

if __name__ == "__main__":
    # Small shapes consistent with the module: input_dim=32, embed_dim=128, 16x16 map.
    B, C, H, W = 2, 32, 16, 16
    E = 128
    N = H * W

    key = jax.random.PRNGKey(0)
    kx, kw, kb = jax.random.split(key, 3)
    x = jax.random.normal(kx, (B, C, H, W), dtype=jnp.float32)
    bound = 1.0 / (C ** 0.5)                      # torch nn.Linear default init scale
    w = jax.random.uniform(kw, (C, E), minval=-bound, maxval=bound, dtype=jnp.float32)
    b = jax.random.uniform(kb, (E,), minval=-bound, maxval=bound, dtype=jnp.float32)

    out = jax.block_until_ready(mlp_pallas(x, w, b))

    # Pure-JAX reference of the module forward (f32, highest precision).
    xt = x.reshape(B, C, N).transpose(0, 2, 1)    # flatten(2).transpose(1, 2)
    ref = jnp.einsum("bnc,ce->bne", xt, w, precision=lax.Precision.HIGHEST) + b

    assert out.shape == (B, N, E), out.shape
    # bf16 operands + bf16 output vs an f32 reference: documented precision choice.
    err = float(jnp.max(jnp.abs(out.astype(jnp.float32) - ref)))
    scale = float(jnp.max(jnp.abs(ref)))
    assert err / scale < 2.5e-2, f"rel err {err / scale:.3e} (abs {err:.3e})"
    print("KERNEL_OK")
</pallas_src>

<mosaic_0001>
module attributes {stable_mosaic.version = 11 : i64} {
  func.func @_linear_embed_kernel(%arg0: i32, %arg1: i32, %arg2: memref<1x32x256xbf16, #tpu.memory_space<vmem>>, %arg3: memref<32x128xbf16, #tpu.memory_space<vmem>>, %arg4: memref<1x128xf32, #tpu.memory_space<vmem>>, %arg5: memref<1x256x128xbf16, #tpu.memory_space<vmem>>) attributes {dimension_semantics = [#tpu.dimension_semantics<parallel>, #tpu.dimension_semantics<parallel>], iteration_bounds = array<i64: 2, 1>, scalar_prefetch = 0 : i64, scratch_operands = 0 : i64, tpu.core_type = #tpu.core_type<tc>, window_params = [{transform_indices = @transform_0, window_bounds = array<i64: 1, 32, 256>}, {pipeline_mode = #tpu.pipeline_mode<synchronous>, transform_indices = @transform_1, window_bounds = array<i64: 32, 128>}, {pipeline_mode = #tpu.pipeline_mode<synchronous>, transform_indices = @transform_2, window_bounds = array<i64: 1, 128>}, {transform_indices = @transform_3, window_bounds = array<i64: 1, 256, 128>}]} {
    %c0 = arith.constant 0 : index
    %c0_0 = arith.constant 0 : index
    %c0_1 = arith.constant 0 : index
    %0 = vector.load %arg2[%c0, %c0_0, %c0_1] : memref<1x32x256xbf16, #tpu.memory_space<vmem>>, vector<1x32x256xbf16>
    %1 = vector.shape_cast %0 : vector<1x32x256xbf16> to vector<32x256xbf16>
    %c0_2 = arith.constant 0 : index
    %c0_3 = arith.constant 0 : index
    %2 = vector.load %arg3[%c0_2, %c0_3] : memref<32x128xbf16, #tpu.memory_space<vmem>>, vector<32x128xbf16>
    %cst = arith.constant dense<0.000000e+00> : vector<256x128xf32>
    %3 = tpu.matmul %1, %2, %cst {dimension_numbers = #tpu.dot_dimension_numbers<[0], [0], [1], [1], [0, 1, 1, 1], [], []>} : vector<32x256xbf16>, vector<32x128xbf16>, vector<256x128xf32> -> vector<256x128xf32>
    %c0_4 = arith.constant 0 : index
    %c0_5 = arith.constant 0 : index
    %4 = vector.load %arg4[%c0_4, %c0_5] : memref<1x128xf32, #tpu.memory_space<vmem>>, vector<1x128xf32>
    %5 = vector.broadcast %4 : vector<1x128xf32> to vector<256x128xf32>
    %6 = arith.addf %3, %5 : vector<256x128xf32>
    %7 = arith.truncf %6 : vector<256x128xf32> to vector<256x128xbf16>
    %c0_6 = arith.constant 0 : index
    %c0_7 = arith.constant 0 : index
    %c0_8 = arith.constant 0 : index
    %8 = vector.load %arg5[%c0_6, %c0_7, %c0_8] : memref<1x256x128xbf16, #tpu.memory_space<vmem>>, vector<1x256x128xbf16>
    %9 = vector.shape_cast %8 : vector<1x256x128xbf16> to vector<256x128xbf16>
    %10 = vector.shape_cast %7 : vector<256x128xbf16> to vector<1x256x128xbf16>
    tpu.vector_store %arg5[%c0_6, %c0_7, %c0_8], %10 {strides = array<i32>} : memref<1x256x128xbf16, #tpu.memory_space<vmem>>, vector<1x256x128xbf16>,
    return
  }
  func.func @transform_0(%arg0: i32, %arg1: i32) -> (i32, i32, i32) {
    %c0_i32 = arith.constant 0 : i32
    %c0_i32_0 = arith.constant 0 : i32
    return %arg0, %c0_i32, %arg1 : i32, i32, i32
  }
  func.func @transform_1(%arg0: i32, %arg1: i32) -> (i32, i32) {
    %c0_i32 = arith.constant 0 : i32
    %c0_i32_0 = arith.constant 0 : i32
    %c0_i32_1 = arith.constant 0 : i32
    return %c0_i32, %c0_i32_0 : i32, i32
  }
  func.func @transform_2(%arg0: i32, %arg1: i32) -> (i32, i32) {
    %c0_i32 = arith.constant 0 : i32
    %c0_i32_0 = arith.constant 0 : i32
    %c0_i32_1 = arith.constant 0 : i32
    return %c0_i32, %c0_i32_0 : i32, i32
  }
  func.func @transform_3(%arg0: i32, %arg1: i32) -> (i32, i32, i32) {
    %c0_i32 = arith.constant 0 : i32
    %c0_i32_0 = arith.constant 0 : i32
    return %arg0, %arg1, %c0_i32 : i32, i32, i32
  }
}

</mosaic_0001>

<llo_original>
// kernel: tpu_custom_call.1
$region0: #{tpu_custom_call.1}
  #allocation0 [shape = 'u32[]', space=smem, size = 0x4, offset = 0x4, fixed_abs, tag = 'smem constant byte address 0x4 - core index']
  #allocation1 [shape = 'u32[144,128]{1,0:T(1,128)}', space=vmem, size = 0x12000, scoped, tag = 'internal scratch']
  %s0 = inlined_call_operand.hbm [shape: bf16[2,32,256], index: 0, kind: input, shape index: {}]
  %s1 = inlined_call_operand.hbm [shape: bf16[32,128], index: 1, kind: input, shape index: {}]
  %s2 = inlined_call_operand.vmem [shape: f32[1,128], index: 2, kind: input, shape index: {}]
  %s3 = inlined_call_operand.hbm [shape: bf16[2,256,128], index: 3, kind: output, shape index: {}]
  %s4 = sld [smem:[#allocation0]]
  $region53: #{tpu_custom_call.1} parent=0
    _
  %s6 = ssub.s32 1, %s4
  %s7 = scalar_select 0, %s6, %s4
  $region1: #{tpu_custom_call.1} parent=0
    #allocation2 [shape = 'u8[32768]{0}', space=vmem, size = 0x8000, scoped, tag = 'input window, operand 0']
    #allocation3 [shape = 's32[2]{0}', space=sflag, size = 0x8, scoped, tag = 'scoped memory for tpu_custom_call.1']
    #allocation4 [shape = 's32[2]{0}', space=sflag, size = 0x8, scoped, tag = 'scoped memory for tpu_custom_call.1']
    #allocation5 [shape = 'u8[8192]{0}', space=vmem, size = 0x2000, scoped, tag = 'input window, operand 1, single buffered']
    #allocation6 [shape = 's32[1]{0}', space=sflag, size = 0x4, scoped, tag = 'scoped memory for tpu_custom_call.1']
    #allocation7 [shape = 'u8[131072]{0}', space=vmem, size = 0x20000, scoped, tag = 'output window, operand 0']
    %8 = vsyncpa [#allocation3], 0
    %s9 = scalar_lea.sflag [#allocation3], 1
    %10 = vsyncpa %s9, 0
    %11 = vsyncpa [#allocation6], 0
    %12 = vsyncpa [#allocation4], 0
    %s13 = scalar_lea.sflag [#allocation4], 1
    %14 = vsyncpa %s13, 0
    loop: start=0, step=1, limit=4
    $region2: #{tpu_custom_call.1} parent=1 // loop_pre_header
      _
    $region3: #{tpu_custom_call.1} parent=1 // loop_header
      %s16 = sphi 0, %s20
      %p17 = scmp.ge.s32.totalorder %s16, 4
      %s23 = sphi 0, %s35
      %s24 = sphi 0, %s31
      %s25 = sphi 0, %s23
      %s26 = sphi 0, %s24
      %s27 = sphi 0, %s25
      %s28 = sphi 0, %s26
      %s40 = sphi 0, %s42
      %s43 = sphi 0, %s40
      %s44 = sphi 0, %s43
      %s60 = sphi 0, %s44
      %s64 = sphi 0, %s64
      %s66 = sphi 0, %s64
      %s67 = sphi 0, %s66
      %s81 = sphi 0, %s67
      %s85 = sphi 0, %s85
      %s87 = sphi 0, %s85
      %s88 = sphi 0, %s87
      %s102 = sphi 0, %s88
      %s110 = sphi 0, %s112
      %s113 = sphi 0, %s110
      %s114 = sphi 0, %s113
      %s130 = sphi 0, %s114
    $region4: #{tpu_custom_call.1} parent=1 // loop_header_branch
      %19 = sbr.rel (%p17) target = $region8
    $region5: #{tpu_custom_call.1} parent=1 // loop_body
      %s21 = ssub.s32 %s16, 1
      %s22 = ssub.s32 %s16, 2
      %s29 = sadd.s32 1, %s24
      %p30 = scmp.ge.s32.totalorder %s29, 1
      %s31 = scalar_select %p30, 0, %s29
      %s32 = sadd.s32 1, %s23
      %s33 = scalar_select %p30, %s32, %s23
      %p34 = scmp.ge.s32.totalorder %s33, 2
      %s35 = scalar_select %p34, 0, %s33
      %s36 = ssub.s32 %s23, %s35
      %s37 = ssub.s32 %s24, %s31
      %s38 = sor.u32 %s36, %s37
      %p39 = scmp.eq.s32.totalorder %s38, 0
      %s41 = sadd.s32 %s40, 1
      %s42 = scalar_select %p39, %s40, %s41
      %p45 = pneg %p39
      %p46 = scmp.eq.s32.totalorder %s16, 1
      %p47 = por %p45, %p46
      %p48 = scmp.ne.s32.totalorder %s40, %s43
      %p49 = scmp.eq.s32.totalorder %s16, 0
      %p50 = por %p48, %p49
      %p51 = scmp.ne.s32.totalorder %s40, %s43
      %p52 = scmp.eq.s32.totalorder %s21, 1
      %p53 = por %p51, %p52
      %p54 = scmp.ne.s32.totalorder %s43, %s44
      %p55 = scmp.eq.s32.totalorder %s21, 0
      %p56 = por %p54, %p55
      %p57 = scmp.ne.s32.totalorder %s43, %s44
      %p58 = scmp.eq.s32.totalorder %s22, 1
      %p59 = por %p57, %p58
      %p61 = scmp.ne.s32.totalorder %s44, %s60
      %p62 = scmp.eq.s32.totalorder %s22, 0
      %p63 = por %p61, %p62
      %s65 = sadd.s32 %s64, 1
      %p68 = scmp.eq.s32.totalorder %s16, 1
      %p69 = scmp.ne.s32.totalorder %s64, %s66
      %p70 = scmp.eq.s32.totalorder %s16, 0
      %p71 = por %p69, %p70
      %p72 = scmp.ne.s32.totalorder %s64, %s66
      %p73 = scmp.eq.s32.totalorder %s21, 1
      %p74 = por %p72, %p73
      %p75 = scmp.ne.s32.totalorder %s66, %s67
      %p76 = scmp.eq.s32.totalorder %s21, 0
      %p77 = por %p75, %p76
      %p78 = scmp.ne.s32.totalorder %s66, %s67
      %p79 = scmp.eq.s32.totalorder %s22, 1
      %p80 = por %p78, %p79
      %p82 = scmp.ne.s32.totalorder %s67, %s81
      %p83 = scmp.eq.s32.totalorder %s22, 0
      %p84 = por %p82, %p83
      %s86 = sadd.s32 %s85, 1
      %p89 = scmp.eq.s32.totalorder %s16, 1
      %p90 = scmp.ne.s32.totalorder %s85, %s87
      %p91 = scmp.eq.s32.totalorder %s16, 0
      %p92 = por %p90, %p91
      %p93 = scmp.ne.s32.totalorder %s85, %s87
      %p94 = scmp.eq.s32.totalorder %s21, 1
      %p95 = por %p93, %p94
      %p96 = scmp.ne.s32.totalorder %s87, %s88
      %p97 = scmp.eq.s32.totalorder %s21, 0
      %p98 = por %p96, %p97
      %p99 = scmp.ne.s32.totalorder %s87, %s88
      %p100 = scmp.eq.s32.totalorder %s22, 1
      %p101 = por %p99, %p100
      %p103 = scmp.ne.s32.totalorder %s88, %s102
      %p104 = scmp.eq.s32.totalorder %s22, 0
      %p105 = por %p103, %p104
      %s106 = ssub.s32 %s23, %s35
      %s107 = ssub.s32 %s24, %s31
      %s108 = sor.u32 %s106, %s107
      %p109 = scmp.eq.s32.totalorder %s108, 0
      %s111 = sadd.s32 %s110, 1
      %s112 = scalar_select %p109, %s110, %s111
      %p115 = pneg %p109
      %p116 = scmp.eq.s32.totalorder %s16, 1
      %p117 = por %p115, %p116
      %p118 = scmp.ne.s32.totalorder %s110, %s113
      %p119 = scmp.eq.s32.totalorder %s16, 0
      %p120 = por %p118, %p119
      %p121 = scmp.ne.s32.totalorder %s110, %s113
      %p122 = scmp.eq.s32.totalorder %s21, 1
      %p123 = por %p121, %p122
      %p124 = scmp.ne.s32.totalorder %s113, %s114
      %p125 = scmp.eq.s32.totalorder %s21, 0
      %p126 = por %p124, %p125
      %p127 = scmp.ne.s32.totalorder %s113, %s114
      %p128 = scmp.eq.s32.totalorder %s22, 1
      %p129 = por %p127, %p128
      %p131 = scmp.ne.s32.totalorder %s114, %s130
      %p132 = scmp.eq.s32.totalorder %s22, 0
      %p133 = por %p131, %p132
      %p134 = scmp.le.s32.totalorder 1, %s16
      %p135 = scmp.lt.s32.totalorder %s16, 3
      %p136 = pnand %p134, %p135
      %p137 = pneg %p136
      // Predicated region
      $region9: #{tpu_custom_call.1} parent=5 // pred_check
        _
      $region10: #{tpu_custom_call.1} parent=5 // pred_check_branch
        %139 = sbr.rel (%p136) target = $region12
      $region11: #{tpu_custom_call.1} parent=5 // pred_region
        %s140 = ssub.s32 %s16, 1
        // Predicated region
        $region13: #{tpu_custom_call.1} parent=11 // pred_check
          %p141 = pneg %p77
        $region14: #{tpu_custom_call.1} parent=11 // pred_check_branch
          %143 = sbr.rel (%p141) target = $region16
        $region15: #{tpu_custom_call.1} parent=11 // pred_region
          %s145 = ssub.s32 256, 256
          %146 = vsyncadd [#allocation6], %s145
          %s147 = sshll.u32 [#allocation5], 4
          %s148 = int_to_ptr.vmem [resolvable:$true] %s147
          %153 = dma.hbm_to_vmem [thread:$0]  %s1, 256, %s148, [#allocation6], 64, 64, 4
        $region16: #{tpu_custom_call.1} parent=11 // pred_fallthru
          _
        // Predicated region
        $region17: #{tpu_custom_call.1} parent=11 // pred_check
          %p154 = pneg %p98
        $region18: #{tpu_custom_call.1} parent=11 // pred_check_branch
          %156 = sbr.rel (%p154) target = $region20
        $region19: #{tpu_custom_call.1} parent=11 // pred_region
          _
        $region20: #{tpu_custom_call.1} parent=11 // pred_fallthru
          _
      $region12: #{tpu_custom_call.1} parent=5 // pred_fallthru
        _
      %p157 = scmp.lt.s32.totalorder %s16, 2
      // Predicated region
      $region21: #{tpu_custom_call.1} parent=5 // pred_check
        %p158 = pneg %p157
      $region22: #{tpu_custom_call.1} parent=5 // pred_check_branch
        %160 = sbr.rel (%p158) target = $region24
      $region23: #{tpu_custom_call.1} parent=5 // pred_region
        // Predicated region
        $region25: #{tpu_custom_call.1} parent=23 // pred_check
          %p161 = pneg %p50
        $region26: #{tpu_custom_call.1} parent=23 // pred_check_branch
          %163 = sbr.rel (%p161) target = $region28
        $region27: #{tpu_custom_call.1} parent=23 // pred_region
          %s164 = sand.u32 %s40, 1
          %s165 = scalar_lea.sflag [#allocation3], %s164
          %s166 = sand.u32 %s40, 1
          %s167 = smul.addr %s166, 32
          %s168 = scalar_lea.vmem [#allocation2], %s167
          %s169 = smul.u32 2, %s24
          %s171 = ssub.s32 512, 512
          %172 = vsyncadd %s165, %s171
          %s173 = smul.addr %s23, 8
          %s174 = sadd.s32 %s169, %s173
          %s175 = smul.addr %s174, 64
          %s176 = scalar_lea.hbm %s0, %s175
          %s177 = sshll.u32 %s168, 4
          %s178 = int_to_ptr.vmem [resolvable:$true] %s177
          %183 = dma.hbm_to_vmem [thread:$0]  %s176, 512, %s178, %s165, 128, 128, 8
        $region28: #{tpu_custom_call.1} parent=23 // pred_fallthru
          _
      $region24: #{tpu_custom_call.1} parent=5 // pred_fallthru
        _
      %p184 = scmp.le.s32.totalorder 1, %s16
      %p185 = scmp.lt.s32.totalorder %s16, 3
      %p186 = pnand %p184, %p185
      %p187 = pneg %p186
      // Predicated region
      $region29: #{tpu_custom_call.1} parent=5 // pred_check
        _
      $region30: #{tpu_custom_call.1} parent=5 // pred_check_branch
        %189 = sbr.rel (%p186) target = $region32
      $region31: #{tpu_custom_call.1} parent=5 // pred_region
        %s190 = ssub.s32 %s16, 1
        %s191 = sand.u32 %s43, 1
        %s192 = scalar_lea.sflag [#allocation3], %s191
        %s193 = sand.u32 %s43, 1
        %s194 = smul.addr %s193, 32
        %s195 = scalar_lea.vmem [#allocation2], %s194
        // Predicated region
        $region33: #{tpu_custom_call.1} parent=31 // pred_check
          %p196 = pneg %p56
        $region34: #{tpu_custom_call.1} parent=31 // pred_check_branch
          %198 = sbr.rel (%p196) target = $region36
        $region35: #{tpu_custom_call.1} parent=31 // pred_region
          %199 = dma.done %s192, 512
        $region36: #{tpu_custom_call.1} parent=31 // pred_fallthru
          _
        // Predicated region
        $region37: #{tpu_custom_call.1} parent=31 // pred_check
          %p200 = pneg %p77
        $region38: #{tpu_custom_call.1} parent=31 // pred_check_branch
          %202 = sbr.rel (%p200) target = $region40
        $region39: #{tpu_custom_call.1} parent=31 // pred_region
          %203 = dma.done [#allocation6], 256
        $region40: #{tpu_custom_call.1} parent=31 // pred_fallthru
          _
        %s204 = sand.u32 %s43, 1
        %s205 = scalar_lea.sflag [#allocation3], %s204
        %s206 = sand.u32 %s43, 1
        %s207 = smul.addr %s206, 32
        %s208 = scalar_lea.vmem [#allocation2], %s207
        %p209 = pneg %p56
        %p210 = pneg %p53
        %p211 = pneg %p77
        %p212 = pneg %p74
        %p213 = pneg %p98
        %p214 = pneg %p95
        %p215 = pneg %p126
        %p216 = pneg %p123
        %s217 = sand.u32 %s113, 1
        %s218 = scalar_lea.sflag [#allocation4], %s217
        %s219 = sand.u32 %s113, 1
        %s220 = smul.addr %s219, 128
        %s221 = scalar_lea.vmem [#allocation7], %s220
        %s222 = smul.u32 2, %s26
        %s223 = smul.u32 32, %s26
        %v225 = vld [vmem:[%s195] sm:$0xff]
        %v226 = vld [vmem:[%s195 + $0x8] sm:$0xff]
        %v227 = vld [vmem:[%s195 + $0x10] sm:$0xff]
        %v228 = vld [vmem:[%s195 + $0x18] sm:$0xff]
        %v229 = vld [vmem:[#allocation5] sm:$0xf]
        %v230 = vld [vmem:[#allocation5 + $0x4] sm:$0xf]
        %v231 = vld [vmem:[#allocation5 + $0x8] sm:$0xf]
        %v232 = vld [vmem:[#allocation5 + $0xc] sm:$0xf]
        %v233 = vld [vmem:[%s2] sm:$0x1]
        %v235 = vlaneseq
        %v236 = vshrl.u32 %v235, 7
        %v237 = vsub.s32 0, %v236
        %v238 = vrot.slane %v233, %v237
        %v244 = vunpack.c.l.b16 %v225
        %v245 = vunpack.c.h.b16 %v225
        %v246 = vunpack.c.l.b16 %v226
        %v247 = vunpack.c.h.b16 %v226
        %v248 = vunpack.c.l.b16 %v227
        %v249 = vunpack.c.h.b16 %v227
        %v250 = vunpack.c.l.b16 %v228
        %v251 = vunpack.c.h.b16 %v228
        %v252 = vpack.c.b16 %v246, %v244
        %v253 = vpack.c.b16 %v247, %v245
        %v254 = vpack.c.b16 %v250, %v248
        %v255 = vpack.c.b16 %v251, %v249
        %260 = vxpose.xlu0.c.b16.start [1/8] %v252, 128
        %261 = vxpose.xlu0.c.b16.cont [2/8] %v254, 128
        %262 = vxpose.xlu0.c.b16.cont [3/8] 0, 128
        %263 = vxpose.xlu0.c.b16.cont [4/8] 0, 128
        %264 = vxpose.xlu0.c.b16.cont [5/8] 0, 128
        %265 = vxpose.xlu0.c.b16.cont [6/8] 0, 128
        %266 = vxpose.xlu0.c.b16.cont [7/8] 0, 128
        %267 = vxpose.xlu0.c.b16.end [8/8] 0, 128
        %v268 = vpop.trf.xlu0
        %v269 = vpop.trf.xlu0
        %v270 = vpop.trf.xlu0
        %v271 = vpop.trf.xlu0
        %v272 = vpop.trf.xlu0
        %v273 = vpop.trf.xlu0
        %v274 = vpop.trf.xlu0
        %v275 = vpop.trf.xlu0
        %276 = vxpose.xlu0.c.b16.start [1/8] %v253, 128
        %277 = vxpose.xlu0.c.b16.cont [2/8] %v255, 128
        %278 = vxpose.xlu0.c.b16.cont [3/8] 0, 128
        %279 = vxpose.xlu0.c.b16.cont [4/8] 0, 128
        %280 = vxpose.xlu0.c.b16.cont [5/8] 0, 128
        %281 = vxpose.xlu0.c.b16.cont [6/8] 0, 128
        %282 = vxpose.xlu0.c.b16.cont [7/8] 0, 128
        %283 = vxpose.xlu0.c.b16.end [8/8] 0, 128
        %v284 = vpop.trf.xlu0
        %v285 = vpop.trf.xlu0
        %v286 = vpop.trf.xlu0
        %v287 = vpop.trf.xlu0
        %v288 = vpop.trf.xlu0
        %v289 = vpop.trf.xlu0
        %v290 = vpop.trf.xlu0
        %v291 = vpop.trf.xlu0
        %v296 = vunpack.c.l.b16 %v229
        %v297 = vunpack.c.l.b16 %v230
        %v298 = vunpack.c.l.b16 %v231
        %v299 = vunpack.c.l.b16 %v232
        %v300 = vpack.c.b16 %v297, %v296
        %v301 = vpack.c.b16 %v299, %v298
        %vm304 = vcmask 261120
        %v306 = vsel %vm304, %v268, 0
        %v309 = vsel %vm304, %v269, 0
        %v312 = vsel %vm304, %v270, 0
        %v315 = vsel %vm304, %v271, 0
        %v318 = vsel %vm304, %v272, 0
        %v321 = vsel %vm304, %v273, 0
        %v324 = vsel %vm304, %v274, 0
        %v327 = vsel %vm304, %v275, 0
        %v330 = vsel %vm304, %v284, 0
        %v333 = vsel %vm304, %v285, 0
        %v336 = vsel %vm304, %v286, 0
        %v339 = vsel %vm304, %v287, 0
        %v342 = vsel %vm304, %v288, 0
        %v345 = vsel %vm304, %v289, 0
        %v348 = vsel %vm304, %v290, 0
        %v351 = vsel %vm304, %v291, 0
        %353 = vmatprep.subr.bf16.mxu0 0
        %354 = vmatpush1.bf16.msra.mxu0 0
        %355 = vmatprep.subr.bf16.mxu0 0
        %356 = vmatpush1.bf16.msra.mxu0 0
        %357 = vmatprep.subr.bf16.mxu0 0
        %358 = vmatpush1.bf16.msra.mxu0 0
        %359 = vmatprep.subr.bf16.mxu0 0
        %360 = vmatpush1.bf16.msra.mxu0 0
        %361 = vmatprep.subr.bf16.mxu0 0
        %362 = vmatpush1.bf16.msra.mxu0 0
        %363 = vmatprep.subr.bf16.mxu0 0
        %364 = vmatpush1.bf16.msra.mxu0 0
        %365 = vmatprep.subr.bf16.mxu0 0
        %366 = vmatpush1.bf16.msra.mxu0 %v301
        %367 = vmatprep.subr.bf16.mxu0 0
        %368 = vmatpush1.bf16.msra.mxu0 %v300
        %369 = vmatprep.subr.bf16.mxu0 0
        %370 = vmatpush2.bf16.msra.mxu0 0
        %371 = vmatprep.subr.bf16.mxu0 0
        %372 = vmatpush2.bf16.msra.mxu0 0
        %373 = vmatprep.subr.bf16.mxu0 0
        %374 = vmatpush2.bf16.msra.mxu0 0
        %375 = vmatprep.subr.bf16.mxu0 0
        %376 = vmatpush2.bf16.msra.mxu0 0
        %377 = vmatprep.subr.bf16.mxu0 0
        %378 = vmatpush2.bf16.msra.mxu0 0
        %379 = vmatprep.subr.bf16.mxu0 0
        %380 = vmatpush2.bf16.msra.mxu0 0
        %381 = vmatprep.subr.bf16.mxu0 0
        %382 = vmatpush2.bf16.msra.mxu0 0
        %383 = vmatprep.subr.bf16.mxu0 0
        %384 = vmatpush2.bf16.msra.mxu0 0
        %385 = vmatprep.mubr.bf16.mxu0 0
        %386 = vmatmul.mubr.bf16.gmra.mxu0 %v306
        %v387 = vpop.f32.mrf.mxu0
        %v388 = vadd.f32 %v238, %v387
        %v389 = vpop.f32.mrf.mxu0
        %v390 = vpop.f32.mrf.mxu0
        %v391 = vadd.f32 %v238, %v390
        %v392 = vpop.f32.mrf.mxu0
        %393 = vmatprep.mubr.bf16.mxu0 0
        %394 = vmatmul.mubr.bf16.gmra.mxu0 %v309
        %v395 = vpop.f32.mrf.mxu0
        %v396 = vadd.f32 %v238, %v395
        %v397 = vpop.f32.mrf.mxu0
        %v398 = vpop.f32.mrf.mxu0
        %v399 = vadd.f32 %v238, %v398
        %v400 = vpop.f32.mrf.mxu0
        %401 = vmatprep.mubr.bf16.mxu0 0
        %402 = vmatmul.mubr.bf16.gmra.mxu0 %v312
        %v403 = vpop.f32.mrf.mxu0
        %v404 = vadd.f32 %v238, %v403
        %v405 = vpop.f32.mrf.mxu0
        %v406 = vpop.f32.mrf.mxu0
        %v407 = vadd.f32 %v238, %v406
        %v408 = vpop.f32.mrf.mxu0
        %409 = vmatprep.mubr.bf16.mxu0 0
        %410 = vmatmul.mubr.bf16.gmra.mxu0 %v315
        %v411 = vpop.f32.mrf.mxu0
        %v412 = vadd.f32 %v238, %v411
        %v413 = vpop.f32.mrf.mxu0
        %v414 = vpop.f32.mrf.mxu0
        %v415 = vadd.f32 %v238, %v414
        %v416 = vpop.f32.mrf.mxu0
        %417 = vmatprep.mubr.bf16.mxu0 0
        %418 = vmatmul.mubr.bf16.gmra.mxu0 %v318
        %v419 = vpop.f32.mrf.mxu0
        %v420 = vadd.f32 %v238, %v419
        %v421 = vpop.f32.mrf.mxu0
        %v422 = vpop.f32.mrf.mxu0
        %v423 = vadd.f32 %v238, %v422
        %v424 = vpop.f32.mrf.mxu0
        %425 = vmatprep.mubr.bf16.mxu0 0
        %426 = vmatmul.mubr.bf16.gmra.mxu0 %v321
        %v427 = vpop.f32.mrf.mxu0
        %v428 = vadd.f32 %v238, %v427
        %v429 = vpop.f32.mrf.mxu0
        %v430 = vpop.f32.mrf.mxu0
        %v431 = vadd.f32 %v238, %v430
        %v432 = vpop.f32.mrf.mxu0
        %433 = vmatprep.mubr.bf16.mxu0 0
        %434 = vmatmul.mubr.bf16.gmra.mxu0 %v324
        %v435 = vpop.f32.mrf.mxu0
        %v436 = vadd.f32 %v238, %v435
        %v437 = vpop.f32.mrf.mxu0
        %v438 = vpop.f32.mrf.mxu0
        %v439 = vadd.f32 %v238, %v438
        %v440 = vpop.f32.mrf.mxu0
        %441 = vmatprep.mubr.bf16.mxu0 0
        %442 = vmatmul.mubr.bf16.gmra.mxu0 %v327
        %v443 = vpop.f32.mrf.mxu0
        %v444 = vadd.f32 %v238, %v443
        %v445 = vpop.f32.mrf.mxu0
        %v446 = vpop.f32.mrf.mxu0
        %v447 = vadd.f32 %v238, %v446
        %v448 = vpop.f32.mrf.mxu0
        %449 = vmatprep.mubr.bf16.mxu0 0
        %450 = vmatmul.mubr.bf16.gmra.mxu0 %v330
        %v451 = vpop.f32.mrf.mxu0
        %v452 = vadd.f32 %v238, %v451
        %v453 = vpop.f32.mrf.mxu0
        %v454 = vpop.f32.mrf.mxu0
        %v455 = vadd.f32 %v238, %v454
        %v456 = vpop.f32.mrf.mxu0
        %457 = vmatprep.mubr.bf16.mxu0 0
        %458 = vmatmul.mubr.bf16.gmra.mxu0 %v333
        %v459 = vpop.f32.mrf.mxu0
        %v460 = vadd.f32 %v238, %v459
        %v461 = vpop.f32.mrf.mxu0
        %v462 = vpop.f32.mrf.mxu0
        %v463 = vadd.f32 %v238, %v462
        %v464 = vpop.f32.mrf.mxu0
        %465 = vmatprep.mubr.bf16.mxu0 0
        %466 = vmatmul.mubr.bf16.gmra.mxu0 %v336
        %v467 = vpop.f32.mrf.mxu0
        %v468 = vadd.f32 %v238, %v467
        %v469 = vpop.f32.mrf.mxu0
        %v470 = vpop.f32.mrf.mxu0
        %v471 = vadd.f32 %v238, %v470
        %v472 = vpop.f32.mrf.mxu0
        %473 = vmatprep.mubr.bf16.mxu0 0
        %474 = vmatmul.mubr.bf16.gmra.mxu0 %v339
        %v475 = vpop.f32.mrf.mxu0
        %v476 = vadd.f32 %v238, %v475
        %v477 = vpop.f32.mrf.mxu0
        %v478 = vpop.f32.mrf.mxu0
        %v479 = vadd.f32 %v238, %v478
        %v480 = vpop.f32.mrf.mxu0
        %481 = vmatprep.mubr.bf16.mxu0 0
        %482 = vmatmul.mubr.bf16.gmra.mxu0 %v342
        %v483 = vpop.f32.mrf.mxu0
        %v484 = vadd.f32 %v238, %v483
        %v485 = vpop.f32.mrf.mxu0
        %v486 = vpop.f32.mrf.mxu0
        %v487 = vadd.f32 %v238, %v486
        %v488 = vpop.f32.mrf.mxu0
        %489 = vmatprep.mubr.bf16.mxu0 0
        %490 = vmatmul.mubr.bf16.gmra.mxu0 %v345
        %v491 = vpop.f32.mrf.mxu0
        %v492 = vadd.f32 %v238, %v491
        %v493 = vpop.f32.mrf.mxu0
        %v494 = vpop.f32.mrf.mxu0
        %v495 = vadd.f32 %v238, %v494
        %v496 = vpop.f32.mrf.mxu0
        %497 = vmatprep.mubr.bf16.mxu0 0
        %498 = vmatmul.mubr.bf16.gmra.mxu0 %v348
        %v499 = vpop.f32.mrf.mxu0
        %v500 = vadd.f32 %v238, %v499
        %v501 = vpop.f32.mrf.mxu0
        %v502 = vpop.f32.mrf.mxu0
        %v503 = vadd.f32 %v238, %v502
        %v504 = vpop.f32.mrf.mxu0
        %505 = vmatprep.mubr.bf16.mxu0 0
        %506 = vmatmul.mubr.bf16.gmra.mxu0 %v351
        %v507 = vpop.f32.mrf.mxu0
        %v508 = vadd.f32 %v238, %v507
        %v509 = vpop.f32.mrf.mxu0
        %v510 = vpop.f32.mrf.mxu0
        %v511 = vadd.f32 %v238, %v510
        %v512 = vpop.f32.mrf.mxu0
        %513 = vdwg.mxu0
        %v514 = vpack.c.bf16 %v391, %v388
        %v515 = vpack.c.bf16 %v399, %v396
        %v516 = vpack.c.bf16 %v407, %v404
        %v517 = vpack.c.bf16 %v415, %v412
        %v518 = vpack.c.bf16 %v423, %v420
        %v519 = vpack.c.bf16 %v431, %v428
        %v520 = vpack.c.bf16 %v439, %v436
        %v521 = vpack.c.bf16 %v447, %v444
        %v522 = vpack.c.bf16 %v455, %v452
        %v523 = vpack.c.bf16 %v463, %v460
        %v524 = vpack.c.bf16 %v471, %v468
        %v525 = vpack.c.bf16 %v479, %v476
        %v526 = vpack.c.bf16 %v487, %v484
        %v527 = vpack.c.bf16 %v495, %v492
        %v528 = vpack.c.bf16 %v503, %v500
        %v529 = vpack.c.bf16 %v511, %v508
        %v546 = vunpack.c.l.b16 %v514
        %v547 = vunpack.c.h.b16 %v514
        %v548 = vunpack.c.l.b16 %v515
        %v549 = vunpack.c.h.b16 %v515
        %v550 = vunpack.c.l.b16 %v516
        %v551 = vunpack.c.h.b16 %v516
        %v552 = vunpack.c.l.b16 %v517
        %v553 = vunpack.c.h.b16 %v517
        %v554 = vunpack.c.l.b16 %v518
        %v555 = vunpack.c.h.b16 %v518
        %v556 = vunpack.c.l.b16 %v519
        %v557 = vunpack.c.h.b16 %v519
        %v558 = vunpack.c.l.b16 %v520
        %v559 = vunpack.c.h.b16 %v520
        %v560 = vunpack.c.l.b16 %v521
        %v561 = vunpack.c.h.b16 %v521
        %v562 = vunpack.c.l.b16 %v522
        %v563 = vunpack.c.h.b16 %v522
        %v564 = vunpack.c.l.b16 %v523
        %v565 = vunpack.c.h.b16 %v523
        %v566 = vunpack.c.l.b16 %v524
        %v567 = vunpack.c.h.b16 %v524
        %v568 = vunpack.c.l.b16 %v525
        %v569 = vunpack.c.h.b16 %v525
        %v570 = vunpack.c.l.b16 %v526
        %v571 = vunpack.c.h.b16 %v526
        %v572 = vunpack.c.l.b16 %v527
        %v573 = vunpack.c.h.b16 %v527
        %v574 = vunpack.c.l.b16 %v528
        %v575 = vunpack.c.h.b16 %v528
        %v576 = vunpack.c.l.b16 %v529
        %v577 = vunpack.c.h.b16 %v529
        %v578 = vpack.c.b16 %v546, %v546
        %v579 = vpack.c.b16 %v547, %v547
        %v580 = vpack.c.b16 %v548, %v548
        %v581 = vpack.c.b16 %v549, %v549
        %v582 = vpack.c.b16 %v550, %v550
        %v583 = vpack.c.b16 %v551, %v551
        %v584 = vpack.c.b16 %v552, %v552
        %v585 = vpack.c.b16 %v553, %v553
        %v586 = vpack.c.b16 %v554, %v554
        %v587 = vpack.c.b16 %v555, %v555
        %v588 = vpack.c.b16 %v556, %v556
        %v589 = vpack.c.b16 %v557, %v557
        %v590 = vpack.c.b16 %v558, %v558
        %v591 = vpack.c.b16 %v559, %v559
        %v592 = vpack.c.b16 %v560, %v560
        %v593 = vpack.c.b16 %v561, %v561
        %v594 = vpack.c.b16 %v562, %v562
        %v595 = vpack.c.b16 %v563, %v563
        %v596 = vpack.c.b16 %v564, %v564
        %v597 = vpack.c.b16 %v565, %v565
        %v598 = vpack.c.b16 %v566, %v566
        %v599 = vpack.c.b16 %v567, %v567
        %v600 = vpack.c.b16 %v568, %v568
        %v601 = vpack.c.b16 %v569, %v569
        %v602 = vpack.c.b16 %v570, %v570
        %v603 = vpack.c.b16 %v571, %v571
        %v604 = vpack.c.b16 %v572, %v572
        %v605 = vpack.c.b16 %v573, %v573
        %v606 = vpack.c.b16 %v574, %v574
        %v607 = vpack.c.b16 %v575, %v575
        %v608 = vpack.c.b16 %v576, %v576
        %v609 = vpack.c.b16 %v577, %v577
        %642 = vst [vmem:[%s221] sm:$0xf] %v578
        %643 = vst [vmem:[%s221 + $0x4] sm:$0xf] %v579
        %644 = vst [vmem:[%s221 + $0x8] sm:$0xf] %v580
        %645 = vst [vmem:[%s221 + $0xc] sm:$0xf] %v581
        %646 = vst [vmem:[%s221 + $0x10] sm:$0xf] %v582
        %647 = vst [vmem:[%s221 + $0x14] sm:$0xf] %v583
        %648 = vst [vmem:[%s221 + $0x18] sm:$0xf] %v584
        %649 = vst [vmem:[%s221 + $0x1c] sm:$0xf] %v585
        %650 = vst [vmem:[%s221 + $0x20] sm:$0xf] %v586
        %651 = vst [vmem:[%s221 + $0x24] sm:$0xf] %v587
        %652 = vst [vmem:[%s221 + $0x28] sm:$0xf] %v588
        %653 = vst [vmem:[%s221 + $0x2c] sm:$0xf] %v589
        %654 = vst [vmem:[%s221 + $0x30] sm:$0xf] %v590
        %655 = vst [vmem:[%s221 + $0x34] sm:$0xf] %v591
        %656 = vst [vmem:[%s221 + $0x38] sm:$0xf] %v592
        %657 = vst [vmem:[%s221 + $0x3c] sm:$0xf] %v593
        %658 = vst [vmem:[%s221 + $0x40] sm:$0xf] %v594
        %659 = vst [vmem:[%s221 + $0x44] sm:$0xf] %v595
        %660 = vst [vmem:[%s221 + $0x48] sm:$0xf] %v596
        %661 = vst [vmem:[%s221 + $0x4c] sm:$0xf] %v597
        %662 = vst [vmem:[%s221 + $0x50] sm:$0xf] %v598
        %663 = vst [vmem:[%s221 + $0x54] sm:$0xf] %v599
        %664 = vst [vmem:[%s221 + $0x58] sm:$0xf] %v600
        %665 = vst [vmem:[%s221 + $0x5c] sm:$0xf] %v601
        %666 = vst [vmem:[%s221 + $0x60] sm:$0xf] %v602
        %667 = vst [vmem:[%s221 + $0x64] sm:$0xf] %v603
        %668 = vst [vmem:[%s221 + $0x68] sm:$0xf] %v604
        %669 = vst [vmem:[%s221 + $0x6c] sm:$0xf] %v605
        %670 = vst [vmem:[%s221 + $0x70] sm:$0xf] %v606
        %671 = vst [vmem:[%s221 + $0x74] sm:$0xf] %v607
        %672 = vst [vmem:[%s221 + $0x78] sm:$0xf] %v608
        %673 = vst [vmem:[%s221 + $0x7c] sm:$0xf] %v609
        %s674 = sand.u32 %s113, 1
        %s675 = scalar_lea.sflag [#allocation4], %s674
        %s676 = sand.u32 %s113, 1
        %s677 = smul.addr %s676, 128
        %s678 = scalar_lea.vmem [#allocation7], %s677
        // Predicated region
        $region41: #{tpu_custom_call.1} parent=31 // pred_check
          %p679 = pneg %p123
        $region42: #{tpu_custom_call.1} parent=31 // pred_check_branch
          %681 = sbr.rel (%p679) target = $region44
        $region43: #{tpu_custom_call.1} parent=31 // pred_region
          %s682 = smul.u32 32, %s26
          %s684 = ssub.s32 2048, 2048
          %685 = vsyncadd %s675, %s684
          %s686 = smul.addr %s25, 32
          %s687 = sadd.s32 %s682, %s686
          %s688 = smul.addr %s687, 64
          %s689 = scalar_lea.hbm %s3, %s688
          %s690 = sshll.u32 %s678, 4
          %s691 = int_to_ptr.vmem [resolvable:$true] %s690
          %696 = dma.vmem_to_hbm [thread:$0]  %s691, 2048, %s689, %s675, 64, 64, 4
        $region44: #{tpu_custom_call.1} parent=31 // pred_fallthru
          _
      $region32: #{tpu_custom_call.1} parent=5 // pred_fallthru
        _
      %p697 = scmp.le.s32.totalorder 2, %s16
      // Predicated region
      $region45: #{tpu_custom_call.1} parent=5 // pred_check
        %p698 = pneg %p697
      $region46: #{tpu_custom_call.1} parent=5 // pred_check_branch
        %700 = sbr.rel (%p698) target = $region48
      $region47: #{tpu_custom_call.1} parent=5 // pred_region
        %s701 = ssub.s32 %s16, 2
        // Predicated region
        $region49: #{tpu_custom_call.1} parent=47 // pred_check
          %p702 = pneg %p129
        $region50: #{tpu_custom_call.1} parent=47 // pred_check_branch
          %704 = sbr.rel (%p702) target = $region52
        $region51: #{tpu_custom_call.1} parent=47 // pred_region
          %s705 = sand.u32 %s114, 1
          %s706 = scalar_lea.sflag [#allocation4], %s705
          %s707 = sand.u32 %s114, 1
          %s708 = smul.addr %s707, 128
          %s709 = scalar_lea.vmem [#allocation7], %s708
          %710 = dma.done %s706, 2048
        $region52: #{tpu_custom_call.1} parent=47 // pred_fallthru
          _
      $region48: #{tpu_custom_call.1} parent=5 // pred_fallthru
        _
    $region6: #{tpu_custom_call.1} parent=1 // loop_footer
      %s20 = sadd.s32 1, %s16
    $region7: #{tpu_custom_call.1} parent=1 // loop_footer_branch
      %15 = sbr.rel target = $region3
    $region8: #{tpu_custom_call.1} parent=1 // loop_exit
      _
    %711 = vsyncpa [#allocation3], 1
    %s712 = scalar_lea.sflag [#allocation3], 1
    %713 = vsyncpa %s712, 1
    %714 = vsyncpa [#allocation6], 1
    %715 = vsyncpa [#allocation4], 1
    %s716 = scalar_lea.sflag [#allocation4], 1
    %717 = vsyncpa %s716, 1

</llo_original>
